<compile_context>
chip_gen: v5e
topology: v5e:2x2
jax: 0.10.0
libtpu: 0.0.40
codegen_flags: <defaults>
</compile_context>

<pallas_src>
import functools

import jax
import jax.numpy as jnp
from jax.experimental import pallas as pl
from jax.experimental.pallas import tpu as pltpu


def _cdiv(a, b):
    return -(-a // b)


def _num_tensorcores():
    """Best-effort TensorCore count (2 on v7x, 1 on v5e/v6e).  Safe default: 2
    (a too-large 'parallel' axis is just a cheap serial loop on 1-TC chips)."""
    try:
        info = pltpu.get_tpu_info()
        for attr in ("num_cores", "core_count", "num_tensorcores", "num_cores_per_chip"):
            v = getattr(info, attr, None)
            if isinstance(v, int) and 0 < v <= 16:
                return v
    except Exception:
        pass
    return 2


def _reg_loss_kernel(p_ref, t_ref, m_ref, out_ref, acc_ref, *,
                     scale, blocks_per_part, total_rows):
    k = pl.program_id(1)

    @pl.when(k == 0)
    def _init():
        acc_ref[...] = jnp.zeros_like(acc_ref)

    # Logical (unclamped) block id -> global row offset of this block.
    blk = pl.program_id(0) * blocks_per_part + k
    block_rows = p_ref.shape[0]
    base_row = blk * block_rows

    # Row-validity mask handles (a) the partial last block and (b) the duplicate block
    # created when num_blocks does not split evenly across TensorCores.
    row = jax.lax.broadcasted_iota(jnp.int32, m_ref.shape, 0) + base_row
    mask_vals = m_ref[...].astype(jnp.int32)
    valid = (mask_vals > 0) & (row < total_rows)

    p = p_ref[...].astype(jnp.float32)
    t = t_ref[...].astype(jnp.float32)

    # Branchless smooth-L1 (beta=1) with the mask folded into d (pure VPU work).
    d = jnp.where(valid, p - t, 0.0)
    ad = jnp.abs(d)
    m = jnp.minimum(ad, 1.0)
    acc_ref[...] += m * (ad - 0.5 * m)

    @pl.when(k == pl.num_programs(1) - 1)
    def _finalize():
        total = jnp.sum(acc_ref[...]) * scale          # single XLU reduce per core
        out_ref[...] = jnp.full(out_ref.shape, total, dtype=jnp.float32)


def reg_loss(labels, pred_locs, targets, batch_size=None, *,
             block_rows=256, lane_width=None, min_pallas_elems=65536,
             vmem_budget_bytes=24 * 1024 * 1024):
    """Pallas implementation of RegLoss.forward.

    Shapes (matching the torch module's permute):
      labels:    [B, C, A]
      pred_locs: [B, A, C]
      targets:   [B, A, C]
    `batch_size` is accepted but unused, exactly as in the torch module
    (the final division uses len(loss) == B).
    """
    assert pred_locs.shape == targets.shape and pred_locs.ndim == 3
    b, a, c = pred_locs.shape
    assert labels.shape == (b, c, a), (labels.shape, pred_locs.shape)

    n = pred_locs.size
    scale = 20.0 / float(b)

    # mask = (labels > 0).permute(0,2,1); compare + int8 narrowing fuse into the
    # transpose copy -> 1 B/elem mask stream instead of 4 B/elem int32 labels.
    mask8 = (jnp.swapaxes(labels, 1, 2) > 0).astype(jnp.int8)

    # Tiny inputs: a fused XLA reduction beats the pallas_call fixed cost.
    if n < max(int(min_pallas_elems), 8 * 128):
        d = pred_locs.astype(jnp.float32) - targets.astype(jnp.float32)
        ad = jnp.abs(d)
        m = jnp.minimum(ad, 1.0)
        return scale * jnp.sum(m * (ad - 0.5 * m) * mask8.astype(jnp.float32))

    # Lane width: prefer the largest of {1024,512,256,128} dividing n so the 2-D
    # lane-dense view is a zero-copy reshape (no HBM pad round trip).
    if lane_width is None:
        lw = next((cand for cand in (1024, 512, 256, 128) if n % cand == 0), 128)
    else:
        assert lane_width % 128 == 0, "lane_width must be a multiple of 128"
        lw = int(lane_width)
    total_rows = _cdiv(n, lw)
    padded_n = total_rows * lw

    def _prep(x):
        if padded_n == n:
            return x.reshape(total_rows, lw)            # free reshape (contiguous)
        flat = x.reshape(-1)                            # rare: pad < lw zeros
        flat = jnp.pad(flat, (0, padded_n - n))         # zeros contribute 0 to the loss
        return flat.reshape(total_rows, lw)

    p2, t2, m2 = _prep(pred_locs), _prep(targets), _prep(mask8)

    # Block rows: multiple of 32 (int8 mask min tile) unless it covers the full array;
    # keep double-buffered inputs (f32+f32+int8) + f32 accumulator under the VMEM budget.
    br = max(32, (int(block_rows) // 32) * 32)
    br = min(br, total_rows)
    while br > 32 and (2 * (4 + 4 + 1) + 4) * br * lw > vmem_budget_bytes:
        br //= 2
    if br < total_rows:
        br = max(32, (br // 32) * 32)

    num_blocks = _cdiv(total_rows, br)
    n_parallel = max(1, min(_num_tensorcores(), num_blocks))
    blocks_per_part = _cdiv(num_blocks, n_parallel)
    last_block = num_blocks - 1

    # Clamp so every DMA origin is a valid (possibly partial) block; the in-kernel
    # row mask zeroes out any duplicate / out-of-range rows.
    def _in_map(p_idx, k_idx):
        return (jnp.minimum(p_idx * blocks_per_part + k_idx, last_block), 0)

    in_spec = pl.BlockSpec((br, lw), _in_map)

    partials = pl.pallas_call(
        functools.partial(_reg_loss_kernel, scale=scale,
                          blocks_per_part=blocks_per_part, total_rows=total_rows),
        out_shape=jax.ShapeDtypeStruct((n_parallel, 8, 128), jnp.float32),
        grid_spec=pltpu.PrefetchScalarGridSpec(
            num_scalar_prefetch=0,
            grid=(n_parallel, blocks_per_part),
            in_specs=[in_spec, in_spec, in_spec],
            out_specs=pl.BlockSpec((1, 8, 128), lambda p_idx, k_idx: (p_idx, 0, 0)),
            scratch_shapes=[pltpu.VMEM((br, lw), jnp.float32)],
        ),
        compiler_params=pltpu.CompilerParams(
            dimension_semantics=("parallel", "arbitrary"),
            vmem_limit_bytes=32 * 1024 * 1024,
        ),
    )(p2, t2, m2)

    # Tiny wrapper-side add of the per-TensorCore partials.
    return jnp.sum(partials[:, 0, 0])


def _reg_loss_ref(labels, pred_locs, targets, batch_size=None):
    """Plain-JAX reference mirroring the PyTorch forward."""
    p = pred_locs.astype(jnp.float32)
    t = targets.astype(jnp.float32)
    d = p - t
    ad = jnp.abs(d)
    sl1 = jnp.where(ad < 1.0, 0.5 * d * d, ad - 0.5)
    mask = jnp.swapaxes((labels > 0).astype(jnp.float32), 1, 2)
    return 20.0 * jnp.sum(sl1 * mask) / p.shape[0]


if __name__ == "__main__":
    def make_inputs(key, b_, a_, c_):
        k1, k2, k3 = jax.random.split(key, 3)
        pred = jax.random.normal(k1, (b_, a_, c_), dtype=jnp.float32)
        tgt = 2.0 * jax.random.normal(k2, (b_, a_, c_), dtype=jnp.float32)
        lab = jax.random.randint(k3, (b_, c_, a_), -1, 2).astype(jnp.int32)  # {-1,0,1}
        return lab, pred, tgt

    B, C = 2, 4

    # 1) Tiny RPN-like shape -> pure-JAX fallback path.
    lab1, pred1, tgt1 = make_inputs(jax.random.PRNGKey(0), B, 16, C)
    out1 = reg_loss(lab1, pred1, tgt1, batch_size=B)
    jax.block_until_ready(out1)
    ref1 = _reg_loss_ref(lab1, pred1, tgt1)
    assert jnp.allclose(out1, ref1, atol=1e-4, rtol=1e-4), (out1, ref1)

    # 2) Pallas path, single full-dim block (zero-copy reshape, lane_width auto-pick).
    lab2, pred2, tgt2 = make_inputs(jax.random.PRNGKey(1), B, 4096, C)
    out2 = reg_loss(lab2, pred2, tgt2, batch_size=B, min_pallas_elems=0)
    jax.block_until_ready(out2)
    ref2 = _reg_loss_ref(lab2, pred2, tgt2)
    assert jnp.allclose(out2, ref2, atol=1e-3, rtol=1e-4), (out2, ref2)

    # 3) Pallas path: multi-block grid, partial tail block, per-core partials and a
    #    duplicate (row-masked) block when num_blocks doesn't split evenly across cores.
    lab3, pred3, tgt3 = make_inputs(jax.random.PRNGKey(2), B, 2304, C)
    out3 = reg_loss(lab3, pred3, tgt3, batch_size=B,
                    block_rows=32, lane_width=128, min_pallas_elems=0)
    jax.block_until_ready(out3)
    ref3 = _reg_loss_ref(lab3, pred3, tgt3)
    assert jnp.allclose(out3, ref3, atol=1e-3, rtol=1e-4), (out3, ref3)

    # 4) Pallas path where n is not a multiple of 128 -> minimal zero-pad branch.
    lab4, pred4, tgt4 = make_inputs(jax.random.PRNGKey(3), B, 1350, 3)
    out4 = reg_loss(lab4, pred4, tgt4, batch_size=B, min_pallas_elems=0)
    jax.block_until_ready(out4)
    ref4 = _reg_loss_ref(lab4, pred4, tgt4)
    assert jnp.allclose(out4, ref4, atol=1e-3, rtol=1e-4), (out4, ref4)

    print("KERNEL_OK")
</pallas_src>

<mosaic_0001>
module attributes {stable_mosaic.version = 11 : i64} {
  func.func @_reg_loss_kernel(%arg0: i32, %arg1: i32, %arg2: memref<32x1024xf32, #tpu.memory_space<vmem>>, %arg3: memref<32x1024xf32, #tpu.memory_space<vmem>>, %arg4: memref<32x1024xi8, #tpu.memory_space<vmem>>, %arg5: memref<1x8x128xf32, #tpu.memory_space<vmem>>, %arg6: memref<32x1024xf32, #tpu.memory_space<vmem>>) attributes {dimension_semantics = [#tpu.dimension_semantics<parallel>, #tpu.dimension_semantics<arbitrary>], iteration_bounds = array<i64: 1, 1>, scalar_prefetch = 0 : i64, scratch_operands = 1 : i64, tpu.core_type = #tpu.core_type<tc>, window_params = [{transform_indices = @transform_0, window_bounds = array<i64: 32, 1024>}, {transform_indices = @transform_1, window_bounds = array<i64: 32, 1024>}, {transform_indices = @transform_2, window_bounds = array<i64: 32, 1024>}, {transform_indices = @transform_3, window_bounds = array<i64: 1, 8, 128>}]} {
    %c0_i32 = arith.constant 0 : i32
    %0 = arith.cmpi eq, %arg1, %c0_i32 : i32
    %1 = arith.extui %0 : i1 to i32
    %c0_i32_0 = arith.constant 0 : i32
    %2 = arith.cmpi ne, %1, %c0_i32_0 : i32
    scf.if %2 {
      %cst_16 = arith.constant 0.000000e+00 : f32
      %34 = vector.broadcast %cst_16 : f32 to vector<32x1024xf32>
      %c0_17 = arith.constant 0 : index
      %c0_18 = arith.constant 0 : index
      %35 = vector.load %arg6[%c0_17, %c0_18] : memref<32x1024xf32, #tpu.memory_space<vmem>>, vector<32x1024xf32>
      tpu.vector_store %arg6[%c0_17, %c0_18], %34 {strides = array<i32>} : memref<32x1024xf32, #tpu.memory_space<vmem>>, vector<32x1024xf32>,
    } else {
    }
    %c1_i32 = arith.constant 1 : i32
    %3 = arith.muli %arg0, %c1_i32 : i32
    %4 = arith.addi %3, %arg1 : i32
    %c32_i32 = arith.constant 32 : i32
    %5 = arith.muli %4, %c32_i32 : i32
    %6 = tpu.iota {dimensions = array<i32: 0>} : vector<32x1024xi32>
    %7 = vector.broadcast %5 : i32 to vector<32x1024xi32>
    %8 = arith.addi %6, %7 : vector<32x1024xi32>
    %c0 = arith.constant 0 : index
    %c0_1 = arith.constant 0 : index
    %9 = vector.load %arg4[%c0, %c0_1] : memref<32x1024xi8, #tpu.memory_space<vmem>>, vector<32x1024xi8>
    %10 = arith.extsi %9 : vector<32x1024xi8> to vector<32x1024xi32>
    %c0_i32_2 = arith.constant 0 : i32
    %11 = vector.broadcast %c0_i32_2 : i32 to vector<32x1024xi32>
    %12 = arith.cmpi sgt, %10, %11 : vector<32x1024xi32>
    %c32_i32_3 = arith.constant 32 : i32
    %13 = vector.broadcast %c32_i32_3 : i32 to vector<32x1024xi32>
    %14 = arith.cmpi slt, %8, %13 : vector<32x1024xi32>
    %15 = arith.andi %12, %14 : vector<32x1024xi1>
    %c0_4 = arith.constant 0 : index
    %c0_5 = arith.constant 0 : index
    %16 = vector.load %arg2[%c0_4, %c0_5] : memref<32x1024xf32, #tpu.memory_space<vmem>>, vector<32x1024xf32>
    %c0_6 = arith.constant 0 : index
    %c0_7 = arith.constant 0 : index
    %17 = vector.load %arg3[%c0_6, %c0_7] : memref<32x1024xf32, #tpu.memory_space<vmem>>, vector<32x1024xf32>
    %18 = arith.subf %16, %17 : vector<32x1024xf32>
    %cst = arith.constant 0.000000e+00 : f32
    %19 = vector.broadcast %cst : f32 to vector<32x1024xf32>
    %20 = arith.select %15, %18, %19 : vector<32x1024xi1>, vector<32x1024xf32>
    %21 = math.absf %20 : vector<32x1024xf32>
    %cst_8 = arith.constant 1.000000e+00 : f32
    %22 = vector.broadcast %cst_8 : f32 to vector<32x1024xf32>
    %23 = arith.minimumf %21, %22 : vector<32x1024xf32>
    %c0_9 = arith.constant 0 : index
    %c0_10 = arith.constant 0 : index
    %24 = vector.load %arg6[%c0_9, %c0_10] : memref<32x1024xf32, #tpu.memory_space<vmem>>, vector<32x1024xf32>
    %cst_11 = arith.constant 5.000000e-01 : f32
    %25 = vector.broadcast %cst_11 : f32 to vector<32x1024xf32>
    %26 = arith.mulf %25, %23 : vector<32x1024xf32>
    %27 = arith.subf %21, %26 : vector<32x1024xf32>
    %28 = arith.mulf %23, %27 : vector<32x1024xf32>
    %29 = arith.addf %24, %28 : vector<32x1024xf32>
    %c0_12 = arith.constant 0 : index
    %c0_13 = arith.constant 0 : index
    %30 = vector.load %arg6[%c0_12, %c0_13] : memref<32x1024xf32, #tpu.memory_space<vmem>>, vector<32x1024xf32>
    tpu.vector_store %arg6[%c0_12, %c0_13], %29 {strides = array<i32>} : memref<32x1024xf32, #tpu.memory_space<vmem>>, vector<32x1024xf32>,
    %c0_i32_14 = arith.constant 0 : i32
    %31 = arith.cmpi eq, %arg1, %c0_i32_14 : i32
    %32 = arith.extui %31 : i1 to i32
    %c0_i32_15 = arith.constant 0 : i32
    %33 = arith.cmpi ne, %32, %c0_i32_15 : i32
    scf.if %33 {
      %c0_16 = arith.constant 0 : index
      %c0_17 = arith.constant 0 : index
      %34 = vector.load %arg6[%c0_16, %c0_17] : memref<32x1024xf32, #tpu.memory_space<vmem>>, vector<32x1024xf32>
      %35 = vector.shape_cast %34 : vector<32x1024xf32> to vector<1x32x1024xf32>
      %cst_18 = arith.constant dense<0.000000e+00> : vector<1xf32>
      %36 = vector.multi_reduction <add>, %35, %cst_18 [1, 2] : vector<1x32x1024xf32> to vector<1xf32>
      %37 = vector.shape_cast %36 : vector<1xf32> to vector<1x1x1xf32>
      %38 = vector.extract %37[0, 0, 0] : f32 from vector<1x1x1xf32>
      %cst_19 = arith.constant 1.000000e+01 : f32
      %39 = arith.mulf %38, %cst_19 : f32
      %40 = vector.broadcast %39 : f32 to vector<1x8x128xf32>
      %c0_20 = arith.constant 0 : index
      %c0_21 = arith.constant 0 : index
      %c0_22 = arith.constant 0 : index
      %41 = vector.load %arg5[%c0_20, %c0_21, %c0_22] : memref<1x8x128xf32, #tpu.memory_space<vmem>>, vector<1x8x128xf32>
      tpu.vector_store %arg5[%c0_20, %c0_21, %c0_22], %40 {strides = array<i32>} : memref<1x8x128xf32, #tpu.memory_space<vmem>>, vector<1x8x128xf32>,
    } else {
    }
    return
  }
  func.func @transform_0(%arg0: i32, %arg1: i32) -> (i32, i32) {
    %c1_i32 = arith.constant 1 : i32
    %0 = arith.muli %arg0, %c1_i32 : i32
    %1 = arith.addi %0, %arg1 : i32
    %c0_i32 = arith.constant 0 : i32
    %2 = arith.minsi %1, %c0_i32 : i32
    %c0_i32_0 = arith.constant 0 : i32
    %c0_i32_1 = arith.constant 0 : i32
    return %2, %c0_i32_0 : i32, i32
  }
  func.func @transform_1(%arg0: i32, %arg1: i32) -> (i32, i32) {
    %c1_i32 = arith.constant 1 : i32
    %0 = arith.muli %arg0, %c1_i32 : i32
    %1 = arith.addi %0, %arg1 : i32
    %c0_i32 = arith.constant 0 : i32
    %2 = arith.minsi %1, %c0_i32 : i32
    %c0_i32_0 = arith.constant 0 : i32
    %c0_i32_1 = arith.constant 0 : i32
    return %2, %c0_i32_0 : i32, i32
  }
  func.func @transform_2(%arg0: i32, %arg1: i32) -> (i32, i32) {
    %c1_i32 = arith.constant 1 : i32
    %0 = arith.muli %arg0, %c1_i32 : i32
    %1 = arith.addi %0, %arg1 : i32
    %c0_i32 = arith.constant 0 : i32
    %2 = arith.minsi %1, %c0_i32 : i32
    %c0_i32_0 = arith.constant 0 : i32
    %c0_i32_1 = arith.constant 0 : i32
    return %2, %c0_i32_0 : i32, i32
  }
  func.func @transform_3(%arg0: i32, %arg1: i32) -> (i32, i32, i32) {
    %c0_i32 = arith.constant 0 : i32
    %c0_i32_0 = arith.constant 0 : i32
    %c0_i32_1 = arith.constant 0 : i32
    return %arg0, %c0_i32, %c0_i32_0 : i32, i32, i32
  }
}

</mosaic_0001>

<llo_original>
// kernel: tpu_custom_call.1
$region0: #{tpu_custom_call.1}
  #allocation0 [shape = 'u32[]', space=smem, size = 0x4, offset = 0x4, fixed_abs, tag = 'smem constant byte address 0x4 - core index']
  #allocation1 [shape = 'u32[72,128]{1,0:T(1,128)}', space=vmem, size = 0x9000, scoped, tag = 'internal scratch']
  #allocation2 [shape = 'f32[32,1024]{1,0:T(8,128)}', space=vmem, size = 0x20000, scoped, tag = 'scratch operand']
  %s0 = inlined_call_operand.hbm [shape: f32[32,1024], index: 0, kind: input, shape index: {}]
  %s1 = inlined_call_operand.hbm [shape: f32[32,1024], index: 1, kind: input, shape index: {}]
  %s2 = inlined_call_operand.hbm [shape: s8[32,1024], index: 2, kind: input, shape index: {}]
  %s3 = inlined_call_operand.hbm [shape: f32[1,8,128], index: 3, kind: output, shape index: {}]
  %s4 = sld [smem:[#allocation0]]
  $region42: #{tpu_custom_call.1} parent=0
    _
  %s6 = ssub.s32 1, %s4
  %s7 = scalar_select 0, %s6, %s4
  $region1: #{tpu_custom_call.1} parent=0
    #allocation3 [shape = 'u8[131072]{0}', space=vmem, size = 0x20000, scoped, tag = 'input window, operand 0, single buffered']
    #allocation4 [shape = 's32[1]{0}', space=sflag, size = 0x4, scoped, tag = 'scoped memory for tpu_custom_call.1']
    #allocation5 [shape = 's32[1]{0}', space=sflag, size = 0x4, scoped, tag = 'scoped memory for tpu_custom_call.1']
    #allocation6 [shape = 'u8[131072]{0}', space=vmem, size = 0x20000, scoped, tag = 'input window, operand 1, single buffered']
    #allocation7 [shape = 's32[1]{0}', space=sflag, size = 0x4, scoped, tag = 'scoped memory for tpu_custom_call.1']
    #allocation8 [shape = 'u8[32768]{0}', space=vmem, size = 0x8000, scoped, tag = 'input window, operand 2, single buffered']
    #allocation9 [shape = 'u8[4096]{0}', space=vmem, size = 0x1000, scoped, tag = 'output window, operand 0, single buffered']
    %8 = vsyncpa [#allocation4], 0
    %9 = vsyncpa [#allocation7], 0
    %10 = vsyncpa [#allocation5], 0
    // Predicated region
    $region2: #{tpu_custom_call.1} parent=1 // pred_check
      _
    $region3: #{tpu_custom_call.1} parent=1 // pred_check_branch
      %12 = sbr.rel (0) target = $region5
    $region4: #{tpu_custom_call.1} parent=1 // pred_region
      %s13 = sadd.s32 0, 0
      %p14 = scmp.lt.s32.totalorder %s13, 0
      %s15 = scalar_select %p14, %s13, 0
      %s16 = smul.u32 4, %s15
      %18 = vsyncadd [#allocation4], 0
      %s19 = smul.addr %s16, 8
      %s20 = smul.addr %s19, 8
      %s21 = scalar_lea.hbm %s0, %s20
      %s22 = sshll.u32 %s21, 4
      %s23 = int_to_ptr.hbm [resolvable:$true] %s22
      %s24 = sshll.u32 [#allocation3], 4
      %s25 = int_to_ptr.vmem [resolvable:$true] %s24
      %30 = dma.hbm_to_vmem [thread:$0]  %s23, 4096, %s25, [#allocation4], 1024, 1024, 64
    $region5: #{tpu_custom_call.1} parent=1 // pred_fallthru
      _
    // Predicated region
    $region6: #{tpu_custom_call.1} parent=1 // pred_check
      _
    $region7: #{tpu_custom_call.1} parent=1 // pred_check_branch
      %32 = sbr.rel (0) target = $region9
    $region8: #{tpu_custom_call.1} parent=1 // pred_region
      %s33 = sadd.s32 0, 0
      %p34 = scmp.lt.s32.totalorder %s33, 0
      %s35 = scalar_select %p34, %s33, 0
      %s36 = smul.u32 4, %s35
      %38 = vsyncadd [#allocation7], 0
      %s39 = smul.addr %s36, 8
      %s40 = smul.addr %s39, 8
      %s41 = scalar_lea.hbm %s1, %s40
      %s42 = sshll.u32 %s41, 4
      %s43 = int_to_ptr.hbm [resolvable:$true] %s42
      %s44 = sshll.u32 [#allocation6], 4
      %s45 = int_to_ptr.vmem [resolvable:$true] %s44
      %50 = dma.hbm_to_vmem [thread:$0]  %s43, 4096, %s45, [#allocation7], 1024, 1024, 64
    $region9: #{tpu_custom_call.1} parent=1 // pred_fallthru
      _
    // Predicated region
    $region10: #{tpu_custom_call.1} parent=1 // pred_check
      _
    $region11: #{tpu_custom_call.1} parent=1 // pred_check_branch
      %52 = sbr.rel (0) target = $region13
    $region12: #{tpu_custom_call.1} parent=1 // pred_region
      %s53 = sadd.s32 0, 0
      %p54 = scmp.lt.s32.totalorder %s53, 0
      %s55 = scalar_select %p54, %s53, 0
      %57 = vsyncadd [#allocation7], 0
      %s58 = smul.addr %s55, 8
      %s59 = smul.addr %s58, 8
      %s60 = scalar_lea.hbm %s2, %s59
      %s62 = sshll.u32 %s60, 4
      %s63 = int_to_ptr.hbm [resolvable:$true] %s62
      %s64 = sshll.u32 [#allocation8], 4
      %s65 = int_to_ptr.vmem [resolvable:$true] %s64
      %67 = dma.hbm_to_vmem [thread:$0]  %s63, 1024, %s65, [#allocation7]
    $region13: #{tpu_custom_call.1} parent=1 // pred_fallthru
      _
    // Predicated region
    $region14: #{tpu_custom_call.1} parent=1 // pred_check
      _
    $region15: #{tpu_custom_call.1} parent=1 // pred_check_branch
      %69 = sbr.rel (0) target = $region17
    $region16: #{tpu_custom_call.1} parent=1 // pred_region
      %71 = dma.done [#allocation4], 4096
    $region17: #{tpu_custom_call.1} parent=1 // pred_fallthru
      _
    // Predicated region
    $region18: #{tpu_custom_call.1} parent=1 // pred_check
      _
    $region19: #{tpu_custom_call.1} parent=1 // pred_check_branch
      %73 = sbr.rel (0) target = $region21
    $region20: #{tpu_custom_call.1} parent=1 // pred_region
      %75 = dma.done [#allocation7], 4096
    $region21: #{tpu_custom_call.1} parent=1 // pred_fallthru
      _
    // Predicated region
    $region22: #{tpu_custom_call.1} parent=1 // pred_check
      _
    $region23: #{tpu_custom_call.1} parent=1 // pred_check_branch
      %77 = sbr.rel (0) target = $region25
    $region24: #{tpu_custom_call.1} parent=1 // pred_region
      %79 = dma.done [#allocation7], 1024
    $region25: #{tpu_custom_call.1} parent=1 // pred_fallthru
      _
    %s80 = sadd.s32 0, 0
    %p81 = scmp.lt.s32.totalorder %s80, 0
    %s82 = scalar_select %p81, %s80, 0
    %s83 = smul.u32 4, %s82
    %s84 = sadd.s32 0, 0
    %p85 = scmp.lt.s32.totalorder %s84, 0
    %s86 = scalar_select %p85, %s84, 0
    %s87 = smul.u32 4, %s86
    %s88 = sadd.s32 0, 0
    %p89 = scmp.lt.s32.totalorder %s88, 0
    %s90 = scalar_select %p89, %s88, 0
    %p91 = scmp.eq.s32.totalorder 0, 0
    // Predicated region
    $region26: #{tpu_custom_call.1} parent=1 // pred_check
      %p92 = pneg %p91
    $region27: #{tpu_custom_call.1} parent=1 // pred_check_branch
      %94 = sbr.rel (%p92) target = $region29
    $region28: #{tpu_custom_call.1} parent=1 // pred_region
      %95 = vst [vmem:[#allocation2] sm:$0xff] 0.0
      %96 = vst [vmem:[#allocation2 + $0x8] sm:$0xff] 0.0
      %97 = vst [vmem:[#allocation2 + $0x10] sm:$0xff] 0.0
      %98 = vst [vmem:[#allocation2 + $0x18] sm:$0xff] 0.0
      %99 = vst [vmem:[#allocation2 + $0x20] sm:$0xff] 0.0
      %100 = vst [vmem:[#allocation2 + $0x28] sm:$0xff] 0.0
      %101 = vst [vmem:[#allocation2 + $0x30] sm:$0xff] 0.0
      %102 = vst [vmem:[#allocation2 + $0x38] sm:$0xff] 0.0
      %103 = vst [vmem:[#allocation2 + $0x40] sm:$0xff] 0.0
      %104 = vst [vmem:[#allocation2 + $0x48] sm:$0xff] 0.0
      %105 = vst [vmem:[#allocation2 + $0x50] sm:$0xff] 0.0
      %106 = vst [vmem:[#allocation2 + $0x58] sm:$0xff] 0.0
      %107 = vst [vmem:[#allocation2 + $0x60] sm:$0xff] 0.0
      %108 = vst [vmem:[#allocation2 + $0x68] sm:$0xff] 0.0
      %109 = vst [vmem:[#allocation2 + $0x70] sm:$0xff] 0.0
      %110 = vst [vmem:[#allocation2 + $0x78] sm:$0xff] 0.0
      %111 = vst [vmem:[#allocation2 + $0x80] sm:$0xff] 0.0
      %112 = vst [vmem:[#allocation2 + $0x88] sm:$0xff] 0.0
      %113 = vst [vmem:[#allocation2 + $0x90] sm:$0xff] 0.0
      %114 = vst [vmem:[#allocation2 + $0x98] sm:$0xff] 0.0
      %115 = vst [vmem:[#allocation2 + $0xa0] sm:$0xff] 0.0
      %116 = vst [vmem:[#allocation2 + $0xa8] sm:$0xff] 0.0
      %117 = vst [vmem:[#allocation2 + $0xb0] sm:$0xff] 0.0
      %118 = vst [vmem:[#allocation2 + $0xb8] sm:$0xff] 0.0
      %119 = vst [vmem:[#allocation2 + $0xc0] sm:$0xff] 0.0
      %120 = vst [vmem:[#allocation2 + $0xc8] sm:$0xff] 0.0
      %121 = vst [vmem:[#allocation2 + $0xd0] sm:$0xff] 0.0
      %122 = vst [vmem:[#allocation2 + $0xd8] sm:$0xff] 0.0
      %123 = vst [vmem:[#allocation2 + $0xe0] sm:$0xff] 0.0
      %124 = vst [vmem:[#allocation2 + $0xe8] sm:$0xff] 0.0
      %125 = vst [vmem:[#allocation2 + $0xf0] sm:$0xff] 0.0
      %126 = vst [vmem:[#allocation2 + $0xf8] sm:$0xff] 0.0
    $region29: #{tpu_custom_call.1} parent=1 // pred_fallthru
      _
    %s127 = sadd.s32 0, 0
    %s128 = smul.u32 %s127, 32
    %v129 = vlaneseq
    %v130 = vshrl.u32 %v129, 7
    %v131 = vadd.s32 %v130, 8
    %v132 = vadd.s32 %v130, 16
    %v133 = vadd.s32 %v130, 24
    %v134 = vstv %s128
    %v135 = vadd.s32 %v130, %v134
    %v136 = vadd.s32 %v131, %v134
    %v137 = vadd.s32 %v132, %v134
    %v138 = vadd.s32 %v133, %v134
    %v139 = vld [vmem:[#allocation8] sm:$0xff]
    %v140 = vld [vmem:[#allocation8 + $0x8] sm:$0xff]
    %v141 = vld [vmem:[#allocation8 + $0x10] sm:$0xff]
    %v142 = vld [vmem:[#allocation8 + $0x18] sm:$0xff]
    %v143 = vld [vmem:[#allocation8 + $0x20] sm:$0xff]
    %v144 = vld [vmem:[#allocation8 + $0x28] sm:$0xff]
    %v145 = vld [vmem:[#allocation8 + $0x30] sm:$0xff]
    %v146 = vld [vmem:[#allocation8 + $0x38] sm:$0xff]
    %v147 = vunpack.c.0.s8 %v139
    %v148 = vunpack.c.0.s8 %v140
    %v149 = vunpack.c.0.s8 %v141
    %v150 = vunpack.c.0.s8 %v142
    %v151 = vunpack.c.0.s8 %v143
    %v152 = vunpack.c.0.s8 %v144
    %v153 = vunpack.c.0.s8 %v145
    %v154 = vunpack.c.0.s8 %v146
    %v155 = vunpack.c.1.s8 %v139
    %v156 = vunpack.c.1.s8 %v140
    %v157 = vunpack.c.1.s8 %v141
    %v158 = vunpack.c.1.s8 %v142
    %v159 = vunpack.c.1.s8 %v143
    %v160 = vunpack.c.1.s8 %v144
    %v161 = vunpack.c.1.s8 %v145
    %v162 = vunpack.c.1.s8 %v146
    %v163 = vunpack.c.2.s8 %v139
    %v164 = vunpack.c.2.s8 %v140
    %v165 = vunpack.c.2.s8 %v141
    %v166 = vunpack.c.2.s8 %v142
    %v167 = vunpack.c.2.s8 %v143
    %v168 = vunpack.c.2.s8 %v144
    %v169 = vunpack.c.2.s8 %v145
    %v170 = vunpack.c.2.s8 %v146
    %v171 = vunpack.c.3.s8 %v139
    %v172 = vunpack.c.3.s8 %v140
    %v173 = vunpack.c.3.s8 %v141
    %v174 = vunpack.c.3.s8 %v142
    %v175 = vunpack.c.3.s8 %v143
    %v176 = vunpack.c.3.s8 %v144
    %v177 = vunpack.c.3.s8 %v145
    %v178 = vunpack.c.3.s8 %v146
    %vm179 = vcmp.gt.s32.totalorder %v147, 0
    %vm180 = vcmp.gt.s32.totalorder %v148, 0
    %vm181 = vcmp.gt.s32.totalorder %v149, 0
    %vm182 = vcmp.gt.s32.totalorder %v150, 0
    %vm183 = vcmp.gt.s32.totalorder %v151, 0
    %vm184 = vcmp.gt.s32.totalorder %v152, 0
    %vm185 = vcmp.gt.s32.totalorder %v153, 0
    %vm186 = vcmp.gt.s32.totalorder %v154, 0
    %vm187 = vcmp.gt.s32.totalorder %v155, 0
    %vm188 = vcmp.gt.s32.totalorder %v156, 0
    %vm189 = vcmp.gt.s32.totalorder %v157, 0
    %vm190 = vcmp.gt.s32.totalorder %v158, 0
    %vm191 = vcmp.gt.s32.totalorder %v159, 0
    %vm192 = vcmp.gt.s32.totalorder %v160, 0
    %vm193 = vcmp.gt.s32.totalorder %v161, 0
    %vm194 = vcmp.gt.s32.totalorder %v162, 0
    %vm195 = vcmp.gt.s32.totalorder %v163, 0
    %vm196 = vcmp.gt.s32.totalorder %v164, 0
    %vm197 = vcmp.gt.s32.totalorder %v165, 0
    %vm198 = vcmp.gt.s32.totalorder %v166, 0
    %vm199 = vcmp.gt.s32.totalorder %v167, 0
    %vm200 = vcmp.gt.s32.totalorder %v168, 0
    %vm201 = vcmp.gt.s32.totalorder %v169, 0
    %vm202 = vcmp.gt.s32.totalorder %v170, 0
    %vm203 = vcmp.gt.s32.totalorder %v171, 0
    %vm204 = vcmp.gt.s32.totalorder %v172, 0
    %vm205 = vcmp.gt.s32.totalorder %v173, 0
    %vm206 = vcmp.gt.s32.totalorder %v174, 0
    %vm207 = vcmp.gt.s32.totalorder %v175, 0
    %vm208 = vcmp.gt.s32.totalorder %v176, 0
    %vm209 = vcmp.gt.s32.totalorder %v177, 0
    %vm210 = vcmp.gt.s32.totalorder %v178, 0
    %vm211 = vcmp.lt.s32.totalorder %v135, 32
    %vm212 = vcmp.lt.s32.totalorder %v136, 32
    %vm213 = vcmp.lt.s32.totalorder %v137, 32
    %vm214 = vcmp.lt.s32.totalorder %v138, 32
    %vm215 = vmand %vm179, %vm211
    %vm216 = vmand %vm180, %vm211
    %vm217 = vmand %vm181, %vm211
    %vm218 = vmand %vm182, %vm211
    %vm219 = vmand %vm183, %vm211
    %vm220 = vmand %vm184, %vm211
    %vm221 = vmand %vm185, %vm211
    %vm222 = vmand %vm186, %vm211
    %vm223 = vmand %vm187, %vm212
    %vm224 = vmand %vm188, %vm212
    %vm225 = vmand %vm189, %vm212
    %vm226 = vmand %vm190, %vm212
    %vm227 = vmand %vm191, %vm212
    %vm228 = vmand %vm192, %vm212
    %vm229 = vmand %vm193, %vm212
    %vm230 = vmand %vm194, %vm212
    %vm231 = vmand %vm195, %vm213
    %vm232 = vmand %vm196, %vm213
    %vm233 = vmand %vm197, %vm213
    %vm234 = vmand %vm198, %vm213
    %vm235 = vmand %vm199, %vm213
    %vm236 = vmand %vm200, %vm213
    %vm237 = vmand %vm201, %vm213
    %vm238 = vmand %vm202, %vm213
    %vm239 = vmand %vm203, %vm214
    %vm240 = vmand %vm204, %vm214
    %vm241 = vmand %vm205, %vm214
    %vm242 = vmand %vm206, %vm214
    %vm243 = vmand %vm207, %vm214
    %vm244 = vmand %vm208, %vm214
    %vm245 = vmand %vm209, %vm214
    %vm246 = vmand %vm210, %vm214
    %v247 = vld [vmem:[#allocation3] sm:$0xff]
    %v248 = vld [vmem:[#allocation3 + $0x8] sm:$0xff]
    %v249 = vld [vmem:[#allocation3 + $0x10] sm:$0xff]
    %v250 = vld [vmem:[#allocation3 + $0x18] sm:$0xff]
    %v251 = vld [vmem:[#allocation3 + $0x20] sm:$0xff]
    %v252 = vld [vmem:[#allocation3 + $0x28] sm:$0xff]
    %v253 = vld [vmem:[#allocation3 + $0x30] sm:$0xff]
    %v254 = vld [vmem:[#allocation3 + $0x38] sm:$0xff]
    %v255 = vld [vmem:[#allocation3 + $0x40] sm:$0xff]
    %v256 = vld [vmem:[#allocation3 + $0x48] sm:$0xff]
    %v257 = vld [vmem:[#allocation3 + $0x50] sm:$0xff]
    %v258 = vld [vmem:[#allocation3 + $0x58] sm:$0xff]
    %v259 = vld [vmem:[#allocation3 + $0x60] sm:$0xff]
    %v260 = vld [vmem:[#allocation3 + $0x68] sm:$0xff]
    %v261 = vld [vmem:[#allocation3 + $0x70] sm:$0xff]
    %v262 = vld [vmem:[#allocation3 + $0x78] sm:$0xff]
    %v263 = vld [vmem:[#allocation3 + $0x80] sm:$0xff]
    %v264 = vld [vmem:[#allocation3 + $0x88] sm:$0xff]
    %v265 = vld [vmem:[#allocation3 + $0x90] sm:$0xff]
    %v266 = vld [vmem:[#allocation3 + $0x98] sm:$0xff]
    %v267 = vld [vmem:[#allocation3 + $0xa0] sm:$0xff]
    %v268 = vld [vmem:[#allocation3 + $0xa8] sm:$0xff]
    %v269 = vld [vmem:[#allocation3 + $0xb0] sm:$0xff]
    %v270 = vld [vmem:[#allocation3 + $0xb8] sm:$0xff]
    %v271 = vld [vmem:[#allocation3 + $0xc0] sm:$0xff]
    %v272 = vld [vmem:[#allocation3 + $0xc8] sm:$0xff]
    %v273 = vld [vmem:[#allocation3 + $0xd0] sm:$0xff]
    %v274 = vld [vmem:[#allocation3 + $0xd8] sm:$0xff]
    %v275 = vld [vmem:[#allocation3 + $0xe0] sm:$0xff]
    %v276 = vld [vmem:[#allocation3 + $0xe8] sm:$0xff]
    %v277 = vld [vmem:[#allocation3 + $0xf0] sm:$0xff]
    %v278 = vld [vmem:[#allocation3 + $0xf8] sm:$0xff]
    %v279 = vld [vmem:[#allocation6] sm:$0xff]
    %v280 = vld [vmem:[#allocation6 + $0x8] sm:$0xff]
    %v281 = vld [vmem:[#allocation6 + $0x10] sm:$0xff]
    %v282 = vld [vmem:[#allocation6 + $0x18] sm:$0xff]
    %v283 = vld [vmem:[#allocation6 + $0x20] sm:$0xff]
    %v284 = vld [vmem:[#allocation6 + $0x28] sm:$0xff]
    %v285 = vld [vmem:[#allocation6 + $0x30] sm:$0xff]
    %v286 = vld [vmem:[#allocation6 + $0x38] sm:$0xff]
    %v287 = vld [vmem:[#allocation6 + $0x40] sm:$0xff]
    %v288 = vld [vmem:[#allocation6 + $0x48] sm:$0xff]
    %v289 = vld [vmem:[#allocation6 + $0x50] sm:$0xff]
    %v290 = vld [vmem:[#allocation6 + $0x58] sm:$0xff]
    %v291 = vld [vmem:[#allocation6 + $0x60] sm:$0xff]
    %v292 = vld [vmem:[#allocation6 + $0x68] sm:$0xff]
    %v293 = vld [vmem:[#allocation6 + $0x70] sm:$0xff]
    %v294 = vld [vmem:[#allocation6 + $0x78] sm:$0xff]
    %v295 = vld [vmem:[#allocation6 + $0x80] sm:$0xff]
    %v296 = vld [vmem:[#allocation6 + $0x88] sm:$0xff]
    %v297 = vld [vmem:[#allocation6 + $0x90] sm:$0xff]
    %v298 = vld [vmem:[#allocation6 + $0x98] sm:$0xff]
    %v299 = vld [vmem:[#allocation6 + $0xa0] sm:$0xff]
    %v300 = vld [vmem:[#allocation6 + $0xa8] sm:$0xff]
    %v301 = vld [vmem:[#allocation6 + $0xb0] sm:$0xff]
    %v302 = vld [vmem:[#allocation6 + $0xb8] sm:$0xff]
    %v303 = vld [vmem:[#allocation6 + $0xc0] sm:$0xff]
    %v304 = vld [vmem:[#allocation6 + $0xc8] sm:$0xff]
    %v305 = vld [vmem:[#allocation6 + $0xd0] sm:$0xff]
    %v306 = vld [vmem:[#allocation6 + $0xd8] sm:$0xff]
    %v307 = vld [vmem:[#allocation6 + $0xe0] sm:$0xff]
    %v308 = vld [vmem:[#allocation6 + $0xe8] sm:$0xff]
    %v309 = vld [vmem:[#allocation6 + $0xf0] sm:$0xff]
    %v310 = vld [vmem:[#allocation6 + $0xf8] sm:$0xff]
    %v311 = vsub.f32 %v247, %v279
    %v312 = vsub.f32 %v248, %v280
    %v313 = vsub.f32 %v249, %v281
    %v314 = vsub.f32 %v250, %v282
    %v315 = vsub.f32 %v251, %v283
    %v316 = vsub.f32 %v252, %v284
    %v317 = vsub.f32 %v253, %v285
    %v318 = vsub.f32 %v254, %v286
    %v319 = vsub.f32 %v255, %v287
    %v320 = vsub.f32 %v256, %v288
    %v321 = vsub.f32 %v257, %v289
    %v322 = vsub.f32 %v258, %v290
    %v323 = vsub.f32 %v259, %v291
    %v324 = vsub.f32 %v260, %v292
    %v325 = vsub.f32 %v261, %v293
    %v326 = vsub.f32 %v262, %v294
    %v327 = vsub.f32 %v263, %v295
    %v328 = vsub.f32 %v264, %v296
    %v329 = vsub.f32 %v265, %v297
    %v330 = vsub.f32 %v266, %v298
    %v331 = vsub.f32 %v267, %v299
    %v332 = vsub.f32 %v268, %v300
    %v333 = vsub.f32 %v269, %v301
    %v334 = vsub.f32 %v270, %v302
    %v335 = vsub.f32 %v271, %v303
    %v336 = vsub.f32 %v272, %v304
    %v337 = vsub.f32 %v273, %v305
    %v338 = vsub.f32 %v274, %v306
    %v339 = vsub.f32 %v275, %v307
    %v340 = vsub.f32 %v276, %v308
    %v341 = vsub.f32 %v277, %v309
    %v342 = vsub.f32 %v278, %v310
    %v343 = vsel %vm215, %v311, 0.0
    %v344 = vsel %vm216, %v312, 0.0
    %v345 = vsel %vm217, %v313, 0.0
    %v346 = vsel %vm218, %v314, 0.0
    %v347 = vsel %vm219, %v315, 0.0
    %v348 = vsel %vm220, %v316, 0.0
    %v349 = vsel %vm221, %v317, 0.0
    %v350 = vsel %vm222, %v318, 0.0
    %v351 = vsel %vm223, %v319, 0.0
    %v352 = vsel %vm224, %v320, 0.0
    %v353 = vsel %vm225, %v321, 0.0
    %v354 = vsel %vm226, %v322, 0.0
    %v355 = vsel %vm227, %v323, 0.0
    %v356 = vsel %vm228, %v324, 0.0
    %v357 = vsel %vm229, %v325, 0.0
    %v358 = vsel %vm230, %v326, 0.0
    %v359 = vsel %vm231, %v327, 0.0
    %v360 = vsel %vm232, %v328, 0.0
    %v361 = vsel %vm233, %v329, 0.0
    %v362 = vsel %vm234, %v330, 0.0
    %v363 = vsel %vm235, %v331, 0.0
    %v364 = vsel %vm236, %v332, 0.0
    %v365 = vsel %vm237, %v333, 0.0
    %v366 = vsel %vm238, %v334, 0.0
    %v367 = vsel %vm239, %v335, 0.0
    %v368 = vsel %vm240, %v336, 0.0
    %v369 = vsel %vm241, %v337, 0.0
    %v370 = vsel %vm242, %v338, 0.0
    %v371 = vsel %vm243, %v339, 0.0
    %v372 = vsel %vm244, %v340, 0.0
    %v373 = vsel %vm245, %v341, 0.0
    %v374 = vsel %vm246, %v342, 0.0
    %v375 = vand.u32 2147483647, %v343
    %v376 = vand.u32 2147483647, %v344
    %v377 = vand.u32 2147483647, %v345
    %v378 = vand.u32 2147483647, %v346
    %v379 = vand.u32 2147483647, %v347
    %v380 = vand.u32 2147483647, %v348
    %v381 = vand.u32 2147483647, %v349
    %v382 = vand.u32 2147483647, %v350
    %v383 = vand.u32 2147483647, %v351
    %v384 = vand.u32 2147483647, %v352
    %v385 = vand.u32 2147483647, %v353
    %v386 = vand.u32 2147483647, %v354
    %v387 = vand.u32 2147483647, %v355
    %v388 = vand.u32 2147483647, %v356
    %v389 = vand.u32 2147483647, %v357
    %v390 = vand.u32 2147483647, %v358
    %v391 = vand.u32 2147483647, %v359
    %v392 = vand.u32 2147483647, %v360
    %v393 = vand.u32 2147483647, %v361
    %v394 = vand.u32 2147483647, %v362
    %v395 = vand.u32 2147483647, %v363
    %v396 = vand.u32 2147483647, %v364
    %v397 = vand.u32 2147483647, %v365
    %v398 = vand.u32 2147483647, %v366
    %v399 = vand.u32 2147483647, %v367
    %v400 = vand.u32 2147483647, %v368
    %v401 = vand.u32 2147483647, %v369
    %v402 = vand.u32 2147483647, %v370
    %v403 = vand.u32 2147483647, %v371
    %v404 = vand.u32 2147483647, %v372
    %v405 = vand.u32 2147483647, %v373
    %v406 = vand.u32 2147483647, %v374
    %v407 = vmin.f32 %v375, 1.0
    %v408 = vmin.f32 %v376, 1.0
    %v409 = vmin.f32 %v377, 1.0
    %v410 = vmin.f32 %v378, 1.0
    %v411 = vmin.f32 %v379, 1.0
    %v412 = vmin.f32 %v380, 1.0
    %v413 = vmin.f32 %v381, 1.0
    %v414 = vmin.f32 %v382, 1.0
    %v415 = vmin.f32 %v383, 1.0
    %v416 = vmin.f32 %v384, 1.0
    %v417 = vmin.f32 %v385, 1.0
    %v418 = vmin.f32 %v386, 1.0
    %v419 = vmin.f32 %v387, 1.0
    %v420 = vmin.f32 %v388, 1.0
    %v421 = vmin.f32 %v389, 1.0
    %v422 = vmin.f32 %v390, 1.0
    %v423 = vmin.f32 %v391, 1.0
    %v424 = vmin.f32 %v392, 1.0
    %v425 = vmin.f32 %v393, 1.0
    %v426 = vmin.f32 %v394, 1.0
    %v427 = vmin.f32 %v395, 1.0
    %v428 = vmin.f32 %v396, 1.0
    %v429 = vmin.f32 %v397, 1.0
    %v430 = vmin.f32 %v398, 1.0
    %v431 = vmin.f32 %v399, 1.0
    %v432 = vmin.f32 %v400, 1.0
    %v433 = vmin.f32 %v401, 1.0
    %v434 = vmin.f32 %v402, 1.0
    %v435 = vmin.f32 %v403, 1.0
    %v436 = vmin.f32 %v404, 1.0
    %v437 = vmin.f32 %v405, 1.0
    %v438 = vmin.f32 %v406, 1.0
    %v439 = vld [vmem:[#allocation2] sm:$0xff]
    %v440 = vld [vmem:[#allocation2 + $0x8] sm:$0xff]
    %v441 = vld [vmem:[#allocation2 + $0x10] sm:$0xff]
    %v442 = vld [vmem:[#allocation2 + $0x18] sm:$0xff]
    %v443 = vld [vmem:[#allocation2 + $0x20] sm:$0xff]
    %v444 = vld [vmem:[#allocation2 + $0x28] sm:$0xff]
    %v445 = vld [vmem:[#allocation2 + $0x30] sm:$0xff]
    %v446 = vld [vmem:[#allocation2 + $0x38] sm:$0xff]
    %v447 = vld [vmem:[#allocation2 + $0x40] sm:$0xff]
    %v448 = vld [vmem:[#allocation2 + $0x48] sm:$0xff]
    %v449 = vld [vmem:[#allocation2 + $0x50] sm:$0xff]
    %v450 = vld [vmem:[#allocation2 + $0x58] sm:$0xff]
    %v451 = vld [vmem:[#allocation2 + $0x60] sm:$0xff]
    %v452 = vld [vmem:[#allocation2 + $0x68] sm:$0xff]
    %v453 = vld [vmem:[#allocation2 + $0x70] sm:$0xff]
    %v454 = vld [vmem:[#allocation2 + $0x78] sm:$0xff]
    %v455 = vld [vmem:[#allocation2 + $0x80] sm:$0xff]
    %v456 = vld [vmem:[#allocation2 + $0x88] sm:$0xff]
    %v457 = vld [vmem:[#allocation2 + $0x90] sm:$0xff]
    %v458 = vld [vmem:[#allocation2 + $0x98] sm:$0xff]
    %v459 = vld [vmem:[#allocation2 + $0xa0] sm:$0xff]
    %v460 = vld [vmem:[#allocation2 + $0xa8] sm:$0xff]
    %v461 = vld [vmem:[#allocation2 + $0xb0] sm:$0xff]
    %v462 = vld [vmem:[#allocation2 + $0xb8] sm:$0xff]
    %v463 = vld [vmem:[#allocation2 + $0xc0] sm:$0xff]
    %v464 = vld [vmem:[#allocation2 + $0xc8] sm:$0xff]
    %v465 = vld [vmem:[#allocation2 + $0xd0] sm:$0xff]
    %v466 = vld [vmem:[#allocation2 + $0xd8] sm:$0xff]
    %v467 = vld [vmem:[#allocation2 + $0xe0] sm:$0xff]
    %v468 = vld [vmem:[#allocation2 + $0xe8] sm:$0xff]
    %v469 = vld [vmem:[#allocation2 + $0xf0] sm:$0xff]
    %v470 = vld [vmem:[#allocation2 + $0xf8] sm:$0xff]
    %v471 = vmul.f32 %v407, 0.5
    %v472 = vmul.f32 %v408, 0.5
    %v473 = vmul.f32 %v409, 0.5
    %v474 = vmul.f32 %v410, 0.5
    %v475 = vmul.f32 %v411, 0.5
    %v476 = vmul.f32 %v412, 0.5
    %v477 = vmul.f32 %v413, 0.5
    %v478 = vmul.f32 %v414, 0.5
    %v479 = vmul.f32 %v415, 0.5
    %v480 = vmul.f32 %v416, 0.5
    %v481 = vmul.f32 %v417, 0.5
    %v482 = vmul.f32 %v418, 0.5
    %v483 = vmul.f32 %v419, 0.5
    %v484 = vmul.f32 %v420, 0.5
    %v485 = vmul.f32 %v421, 0.5
    %v486 = vmul.f32 %v422, 0.5
    %v487 = vmul.f32 %v423, 0.5
    %v488 = vmul.f32 %v424, 0.5
    %v489 = vmul.f32 %v425, 0.5
    %v490 = vmul.f32 %v426, 0.5
    %v491 = vmul.f32 %v427, 0.5
    %v492 = vmul.f32 %v428, 0.5
    %v493 = vmul.f32 %v429, 0.5
    %v494 = vmul.f32 %v430, 0.5
    %v495 = vmul.f32 %v431, 0.5
    %v496 = vmul.f32 %v432, 0.5
    %v497 = vmul.f32 %v433, 0.5
    %v498 = vmul.f32 %v434, 0.5
    %v499 = vmul.f32 %v435, 0.5
    %v500 = vmul.f32 %v436, 0.5
    %v501 = vmul.f32 %v437, 0.5
    %v502 = vmul.f32 %v438, 0.5
    %v503 = vsub.f32 %v375, %v471
    %v504 = vsub.f32 %v376, %v472
    %v505 = vsub.f32 %v377, %v473
    %v506 = vsub.f32 %v378, %v474
    %v507 = vsub.f32 %v379, %v475
    %v508 = vsub.f32 %v380, %v476
    %v509 = vsub.f32 %v381, %v477
    %v510 = vsub.f32 %v382, %v478
    %v511 = vsub.f32 %v383, %v479
    %v512 = vsub.f32 %v384, %v480
    %v513 = vsub.f32 %v385, %v481
    %v514 = vsub.f32 %v386, %v482
    %v515 = vsub.f32 %v387, %v483
    %v516 = vsub.f32 %v388, %v484
    %v517 = vsub.f32 %v389, %v485
    %v518 = vsub.f32 %v390, %v486
    %v519 = vsub.f32 %v391, %v487
    %v520 = vsub.f32 %v392, %v488
    %v521 = vsub.f32 %v393, %v489
    %v522 = vsub.f32 %v394, %v490
    %v523 = vsub.f32 %v395, %v491
    %v524 = vsub.f32 %v396, %v492
    %v525 = vsub.f32 %v397, %v493
    %v526 = vsub.f32 %v398, %v494
    %v527 = vsub.f32 %v399, %v495
    %v528 = vsub.f32 %v400, %v496
    %v529 = vsub.f32 %v401, %v497
    %v530 = vsub.f32 %v402, %v498
    %v531 = vsub.f32 %v403, %v499
    %v532 = vsub.f32 %v404, %v500
    %v533 = vsub.f32 %v405, %v501
    %v534 = vsub.f32 %v406, %v502
    %v535 = vmul.f32 %v407, %v503
    %v536 = vmul.f32 %v408, %v504
    %v537 = vmul.f32 %v409, %v505
    %v538 = vmul.f32 %v410, %v506
    %v539 = vmul.f32 %v411, %v507
    %v540 = vmul.f32 %v412, %v508
    %v541 = vmul.f32 %v413, %v509
    %v542 = vmul.f32 %v414, %v510
    %v543 = vmul.f32 %v415, %v511
    %v544 = vmul.f32 %v416, %v512
    %v545 = vmul.f32 %v417, %v513
    %v546 = vmul.f32 %v418, %v514
    %v547 = vmul.f32 %v419, %v515
    %v548 = vmul.f32 %v420, %v516
    %v549 = vmul.f32 %v421, %v517
    %v550 = vmul.f32 %v422, %v518
    %v551 = vmul.f32 %v423, %v519
    %v552 = vmul.f32 %v424, %v520
    %v553 = vmul.f32 %v425, %v521
    %v554 = vmul.f32 %v426, %v522
    %v555 = vmul.f32 %v427, %v523
    %v556 = vmul.f32 %v428, %v524
    %v557 = vmul.f32 %v429, %v525
    %v558 = vmul.f32 %v430, %v526
    %v559 = vmul.f32 %v431, %v527
    %v560 = vmul.f32 %v432, %v528
    %v561 = vmul.f32 %v433, %v529
    %v562 = vmul.f32 %v434, %v530
    %v563 = vmul.f32 %v435, %v531
    %v564 = vmul.f32 %v436, %v532
    %v565 = vmul.f32 %v437, %v533
    %v566 = vmul.f32 %v438, %v534
    %v567 = vadd.f32 %v439, %v535
    %v568 = vadd.f32 %v440, %v536
    %v569 = vadd.f32 %v441, %v537
    %v570 = vadd.f32 %v442, %v538
    %v571 = vadd.f32 %v443, %v539
    %v572 = vadd.f32 %v444, %v540
    %v573 = vadd.f32 %v445, %v541
    %v574 = vadd.f32 %v446, %v542
    %v575 = vadd.f32 %v447, %v543
    %v576 = vadd.f32 %v448, %v544
    %v577 = vadd.f32 %v449, %v545
    %v578 = vadd.f32 %v450, %v546
    %v579 = vadd.f32 %v451, %v547
    %v580 = vadd.f32 %v452, %v548
    %v581 = vadd.f32 %v453, %v549
    %v582 = vadd.f32 %v454, %v550
    %v583 = vadd.f32 %v455, %v551
    %v584 = vadd.f32 %v456, %v552
    %v585 = vadd.f32 %v457, %v553
    %v586 = vadd.f32 %v458, %v554
    %v587 = vadd.f32 %v459, %v555
    %v588 = vadd.f32 %v460, %v556
    %v589 = vadd.f32 %v461, %v557
    %v590 = vadd.f32 %v462, %v558
    %v591 = vadd.f32 %v463, %v559
    %v592 = vadd.f32 %v464, %v560
    %v593 = vadd.f32 %v465, %v561
    %v594 = vadd.f32 %v466, %v562
    %v595 = vadd.f32 %v467, %v563
    %v596 = vadd.f32 %v468, %v564
    %v597 = vadd.f32 %v469, %v565
    %v598 = vadd.f32 %v470, %v566
    %599 = vst [vmem:[#allocation2] sm:$0xff] %v567
    %600 = vst [vmem:[#allocation2 + $0x8] sm:$0xff] %v568
    %601 = vst [vmem:[#allocation2 + $0x10] sm:$0xff] %v569
    %602 = vst [vmem:[#allocation2 + $0x18] sm:$0xff] %v570
    %603 = vst [vmem:[#allocation2 + $0x20] sm:$0xff] %v571
    %604 = vst [vmem:[#allocation2 + $0x28] sm:$0xff] %v572
    %605 = vst [vmem:[#allocation2 + $0x30] sm:$0xff] %v573
    %606 = vst [vmem:[#allocation2 + $0x38] sm:$0xff] %v574
    %607 = vst [vmem:[#allocation2 + $0x40] sm:$0xff] %v575
    %608 = vst [vmem:[#allocation2 + $0x48] sm:$0xff] %v576
    %609 = vst [vmem:[#allocation2 + $0x50] sm:$0xff] %v577
    %610 = vst [vmem:[#allocation2 + $0x58] sm:$0xff] %v578
    %611 = vst [vmem:[#allocation2 + $0x60] sm:$0xff] %v579
    %612 = vst [vmem:[#allocation2 + $0x68] sm:$0xff] %v580
    %613 = vst [vmem:[#allocation2 + $0x70] sm:$0xff] %v581
    %614 = vst [vmem:[#allocation2 + $0x78] sm:$0xff] %v582
    %615 = vst [vmem:[#allocation2 + $0x80] sm:$0xff] %v583
    %616 = vst [vmem:[#allocation2 + $0x88] sm:$0xff] %v584
    %617 = vst [vmem:[#allocation2 + $0x90] sm:$0xff] %v585
    %618 = vst [vmem:[#allocation2 + $0x98] sm:$0xff] %v586
    %619 = vst [vmem:[#allocation2 + $0xa0] sm:$0xff] %v587
    %620 = vst [vmem:[#allocation2 + $0xa8] sm:$0xff] %v588
    %621 = vst [vmem:[#allocation2 + $0xb0] sm:$0xff] %v589
    %622 = vst [vmem:[#allocation2 + $0xb8] sm:$0xff] %v590
    %623 = vst [vmem:[#allocation2 + $0xc0] sm:$0xff] %v591
    %624 = vst [vmem:[#allocation2 + $0xc8] sm:$0xff] %v592
    %625 = vst [vmem:[#allocation2 + $0xd0] sm:$0xff] %v593
    %626 = vst [vmem:[#allocation2 + $0xd8] sm:$0xff] %v594
    %627 = vst [vmem:[#allocation2 + $0xe0] sm:$0xff] %v595
    %628 = vst [vmem:[#allocation2 + $0xe8] sm:$0xff] %v596
    %629 = vst [vmem:[#allocation2 + $0xf0] sm:$0xff] %v597
    %630 = vst [vmem:[#allocation2 + $0xf8] sm:$0xff] %v598
    // Predicated region
    $region30: #{tpu_custom_call.1} parent=1 // pred_check
      %p631 = pneg %p91
    $region31: #{tpu_custom_call.1} parent=1 // pred_check_branch
      %633 = sbr.rel (%p631) target = $region33
    $region32: #{tpu_custom_call.1} parent=1 // pred_region
      %v634 = vld [vmem:[#allocation2] sm:$0xff]
      %v635 = vld [vmem:[#allocation2 + $0x8] sm:$0xff]
      %v636 = vld [vmem:[#allocation2 + $0x10] sm:$0xff]
      %v637 = vld [vmem:[#allocation2 + $0x18] sm:$0xff]
      %v638 = vld [vmem:[#allocation2 + $0x20] sm:$0xff]
      %v639 = vld [vmem:[#allocation2 + $0x28] sm:$0xff]
      %v640 = vld [vmem:[#allocation2 + $0x30] sm:$0xff]
      %v641 = vld [vmem:[#allocation2 + $0x38] sm:$0xff]
      %v642 = vld [vmem:[#allocation2 + $0x40] sm:$0xff]
      %v643 = vld [vmem:[#allocation2 + $0x48] sm:$0xff]
      %v644 = vld [vmem:[#allocation2 + $0x50] sm:$0xff]
      %v645 = vld [vmem:[#allocation2 + $0x58] sm:$0xff]
      %v646 = vld [vmem:[#allocation2 + $0x60] sm:$0xff]
      %v647 = vld [vmem:[#allocation2 + $0x68] sm:$0xff]
      %v648 = vld [vmem:[#allocation2 + $0x70] sm:$0xff]
      %v649 = vld [vmem:[#allocation2 + $0x78] sm:$0xff]
      %v650 = vld [vmem:[#allocation2 + $0x80] sm:$0xff]
      %v651 = vld [vmem:[#allocation2 + $0x88] sm:$0xff]
      %v652 = vld [vmem:[#allocation2 + $0x90] sm:$0xff]
      %v653 = vld [vmem:[#allocation2 + $0x98] sm:$0xff]
      %v654 = vld [vmem:[#allocation2 + $0xa0] sm:$0xff]
      %v655 = vld [vmem:[#allocation2 + $0xa8] sm:$0xff]
      %v656 = vld [vmem:[#allocation2 + $0xb0] sm:$0xff]
      %v657 = vld [vmem:[#allocation2 + $0xb8] sm:$0xff]
      %v658 = vld [vmem:[#allocation2 + $0xc0] sm:$0xff]
      %v659 = vld [vmem:[#allocation2 + $0xc8] sm:$0xff]
      %v660 = vld [vmem:[#allocation2 + $0xd0] sm:$0xff]
      %v661 = vld [vmem:[#allocation2 + $0xd8] sm:$0xff]
      %v662 = vld [vmem:[#allocation2 + $0xe0] sm:$0xff]
      %v663 = vld [vmem:[#allocation2 + $0xe8] sm:$0xff]
      %v664 = vld [vmem:[#allocation2 + $0xf0] sm:$0xff]
      %v665 = vld [vmem:[#allocation2 + $0xf8] sm:$0xff]
      %v666 = vadd.f32 %v634, %v635
      %v667 = vadd.f32 %v666, %v636
      %v668 = vadd.f32 %v667, %v637
      %v669 = vadd.f32 %v668, %v638
      %v670 = vadd.f32 %v669, %v639
      %v671 = vadd.f32 %v670, %v640
      %v672 = vadd.f32 %v671, %v641
      %v673 = vadd.f32 %v672, %v642
      %v674 = vadd.f32 %v673, %v643
      %v675 = vadd.f32 %v674, %v644
      %v676 = vadd.f32 %v675, %v645
      %v677 = vadd.f32 %v676, %v646
      %v678 = vadd.f32 %v677, %v647
      %v679 = vadd.f32 %v678, %v648
      %v680 = vadd.f32 %v679, %v649
      %v681 = vadd.f32 %v680, %v650
      %v682 = vadd.f32 %v681, %v651
      %v683 = vadd.f32 %v682, %v652
      %v684 = vadd.f32 %v683, %v653
      %v685 = vadd.f32 %v684, %v654
      %v686 = vadd.f32 %v685, %v655
      %v687 = vadd.f32 %v686, %v656
      %v688 = vadd.f32 %v687, %v657
      %v689 = vadd.f32 %v688, %v658
      %v690 = vadd.f32 %v689, %v659
      %v691 = vadd.f32 %v690, %v660
      %v692 = vadd.f32 %v691, %v661
      %v693 = vadd.f32 %v692, %v662
      %v694 = vadd.f32 %v693, %v663
      %v695 = vadd.f32 %v694, %v664
      %v696 = vadd.f32 %v695, %v665
      %697 = vadd.xlane.f32.xlu0 %v696
      %v698 = vpop.xlane.xlu0 %697
      %v699 = vrot.slane %v698, 4
      %v700 = vadd.f32 %v698, %v699
      %v701 = vrot.slane %v700, 2
      %v702 = vadd.f32 %v700, %v701
      %v703 = vrot.slane %v702, 1
      %v704 = vadd.f32 %v702, %v703
      %s705 = vtos %v704
      %s706 = smul.f32 %s705, 10.0
      %v707 = vstv %s706
      %708 = vst [vmem:[#allocation9] sm:$0xff] %v707
    $region33: #{tpu_custom_call.1} parent=1 // pred_fallthru
      _
    // Predicated region
    $region34: #{tpu_custom_call.1} parent=1 // pred_check
      _
    $region35: #{tpu_custom_call.1} parent=1 // pred_check_branch
      %710 = sbr.rel (0) target = $region37
    $region36: #{tpu_custom_call.1} parent=1 // pred_region
      %712 = vsyncadd [#allocation5], 0
      %s714 = sshll.u32 [#allocation9], 4
      %s715 = int_to_ptr.vmem [resolvable:$true] %s714
      %s716 = sshll.u32 %s3, 4
      %s717 = int_to_ptr.hbm [resolvable:$true] %s716
      %719 = dma.vmem_to_hbm [thread:$0]  %s715, 128, %s717, [#allocation5]
    $region37: #{tpu_custom_call.1} parent=1 // pred_fallthru
      _
    // Predicated region
    $region38: #{tpu_custom_call.1} parent=1 // pred_check
      _
    $region39: #{tpu_custom_call.1} parent=1 // pred_check_branch
      %721 = sbr.rel (0) target = $region41
    $region40: #{tpu_custom_call.1} parent=1 // pred_region
      %723 = dma.done [#allocation5], 128
    $region41: #{tpu_custom_call.1} parent=1 // pred_fallthru
      _
    %724 = vsyncpa [#allocation4], 1
    %725 = vsyncpa [#allocation7], 1
    %726 = vsyncpa [#allocation5], 1

</llo_original>
